<compile_context>
chip_gen: v7x
topology: tpu7x:2x2x1
jax: 0.10.0
libtpu: 0.0.40
codegen_flags: <defaults>
</compile_context>

<pallas_src>
import functools

import jax
import jax.numpy as jnp
from jax.experimental import pallas as pl
from jax.experimental.pallas import tpu as pltpu

STONE_NUM = 5
IN_FEATURES = STONE_NUM * 4          # 20
HIDDEN = 16
FUSED_HIDDEN = 2 * HIDDEN            # 32 (state branch || advantage branch)
MIN_TILE_B = 128                     # one lane-width of batch rows
TILE_B_MAX = 32768                   # lane-dense layout: ~12-15 MiB VMEM at this tile


def _qnet_kernel(x_ref, w1_ref, b1_ref, w2_ref, b2_ref, out_ref):
    """One batch tile, batch on lanes.
    x_ref: (20, tb) bf16, w1_ref: (32, 20) bf16, b1_ref: (32, 1) f32,
    w2_ref: (n_action, 32) f32 (dueling combine pre-folded), b2_ref: (n_action, 1) f32,
    out_ref: (n_action, tb) f32."""
    # Layer 1 (both branches fused): (32,20)@(20,tb) on the MXU, f32 accumulate.
    h = jnp.dot(w1_ref[...], x_ref[...], preferred_element_type=jnp.float32)
    h = jnp.maximum(h + b1_ref[...], 0.0)                      # (32, tb) f32
    # Layer 2 + dueling combine (folded into w2/b2 at pack time), f32 throughout.
    q = jnp.dot(w2_ref[...], h, preferred_element_type=jnp.float32) + b2_ref[...]
    out_ref[...] = q.astype(out_ref.dtype)                     # lane-dense store


def pack_params(params, compute_dtype=jnp.bfloat16):
    """Fuse both branches and fold the dueling combine (it is linear) at pack time.

    Returns transposed operands for the batch-on-lanes kernel:
      w1t (32, 20) bf16, b1t (32, 1) f32, w2t (n_action, 32) f32, b2t (n_action, 1) f32
    such that q^T = w2t @ relu(w1t @ x^T + b1t) + b2t reproduces
      Q = V + A - mean(A, axis=1, keepdims=True).
    """
    n_action = params["w2a"].shape[1]
    # Layer 1: [state | advantage] stacked along hidden, then transposed.
    w1t = jnp.concatenate([params["w1s"], params["w1a"]], axis=1).T     # (32, 20)
    b1t = jnp.concatenate([params["b1s"], params["b1a"]], axis=1).T     # (32, 1)
    # Layer 2 with the dueling combine folded in (exact — the combine is linear):
    #   Q_i = V + A_i - mean_j A_j
    w2s, w2a = params["w2s"], params["w2a"]          # (16, 1), (16, n)
    b2s, b2a = params["b2s"], params["b2a"]          # (1, 1),  (1, n)
    w2a_c = w2a - jnp.mean(w2a, axis=1, keepdims=True)
    w2t = jnp.concatenate([jnp.tile(w2s, (1, n_action)), w2a_c], axis=0).T   # (n, 32)
    b2t = (b2s + b2a - jnp.mean(b2a, axis=1, keepdims=True)).T               # (n, 1)
    return dict(
        w1t=w1t.astype(compute_dtype),
        b1t=b1t.astype(jnp.float32),
        w2t=w2t.astype(jnp.float32),    # 2nd matmul stays f32 (K=32, cost is noise)
        b2t=b2t.astype(jnp.float32),
        n_action=n_action,
    )


def _tile_plan(B, tile_b_max):
    """Fixed power-of-two ladder -> cached compiles across ragged batch sizes;
    >= 2 grid steps whenever there is enough work (v7x megacore)."""
    b_pad = MIN_TILE_B
    while b_pad < B and b_pad < tile_b_max:
        b_pad *= 2
    if B > b_pad:                                         # B > tile_b_max
        b_pad = -(-B // tile_b_max) * tile_b_max          # round up to tile multiple
    tb = min(b_pad, tile_b_max)
    if tb == b_pad and b_pad >= 2 * MIN_TILE_B:
        tb = b_pad // 2                                   # give megacore 2 steps
    return b_pad, tb


@functools.partial(jax.jit, static_argnames=("n_action", "tile_b_max"))
def _forward_jit(obs, w1t, b1t, w2t, b2t, *, n_action, tile_b_max):
    B = obs.shape[0]
    x_t = obs.reshape(B, -1).T.astype(w1t.dtype)          # (20, B) bf16, fused by XLA
    b_pad, tb = _tile_plan(B, tile_b_max)
    if b_pad != B:
        x_t = jnp.pad(x_t, ((0, 0), (0, b_pad - B)))      # padded cols computed, discarded

    out = pl.pallas_call(
        _qnet_kernel,
        out_shape=jax.ShapeDtypeStruct((n_action, b_pad), jnp.float32),
        grid_spec=pltpu.PrefetchScalarGridSpec(
            num_scalar_prefetch=0,
            grid=(b_pad // tb,),
            in_specs=[
                pl.BlockSpec((IN_FEATURES, tb), lambda i: (0, i)),
                # weights/biases: constant index_map -> VMEM-resident across steps
                pl.BlockSpec((FUSED_HIDDEN, IN_FEATURES), lambda i: (0, 0)),
                pl.BlockSpec((FUSED_HIDDEN, 1), lambda i: (0, 0)),
                pl.BlockSpec((n_action, FUSED_HIDDEN), lambda i: (0, 0)),
                pl.BlockSpec((n_action, 1), lambda i: (0, 0)),
            ],
            out_specs=pl.BlockSpec((n_action, tb), lambda i: (0, i)),
        ),
        compiler_params=pltpu.CompilerParams(
            dimension_semantics=("parallel",),            # megacore sharding on v7x
            vmem_limit_bytes=32 * 1024 * 1024,            # covers v5e default, fits v7x
        ),
    )(x_t, w1t, b1t, w2t, b2t)
    return out[:, :B].T                                   # (B, n_action) f32


def cnn_qnetwork_forward(obs, packed, *, tile_b_max=TILE_B_MAX):
    """obs: (B, STONE_NUM, 4) or (B, STONE_NUM*4). Returns (B, n_action) f32."""
    return _forward_jit(obs, packed["w1t"], packed["b1t"], packed["w2t"],
                        packed["b2t"], n_action=packed["n_action"],
                        tile_b_max=tile_b_max)


def init_params(key, n_action):
    """Deterministic synthetic parameters (shapes match the nn.Linear layers)."""
    ks = jax.random.split(key, 8)

    def linear(kw, kb, fan_in, fan_out):
        bound = 1.0 / jnp.sqrt(fan_in)
        w = jax.random.uniform(kw, (fan_in, fan_out), jnp.float32, -bound, bound)
        b = jax.random.uniform(kb, (1, fan_out), jnp.float32, -bound, bound)
        return w, b

    w1s, b1s = linear(ks[0], ks[1], IN_FEATURES, HIDDEN)
    w2s, b2s = linear(ks[2], ks[3], HIDDEN, 1)
    w1a, b1a = linear(ks[4], ks[5], IN_FEATURES, HIDDEN)
    w2a, b2a = linear(ks[6], ks[7], HIDDEN, n_action)
    return dict(w1s=w1s, b1s=b1s, w2s=w2s, b2s=b2s,
                w1a=w1a, b1a=b1a, w2a=w2a, b2a=b2a)


def reference_forward(obs, params):
    x = obs.reshape(obs.shape[0], -1).astype(jnp.float32)
    h_s = jnp.maximum(x @ params["w1s"] + params["b1s"], 0.0)
    v = h_s @ params["w2s"] + params["b2s"]
    h_a = jnp.maximum(x @ params["w1a"] + params["b1a"], 0.0)
    a = h_a @ params["w2a"] + params["b2a"]
    return v + a - jnp.mean(a, axis=1, keepdims=True)


if __name__ == "__main__":
    key = jax.random.PRNGKey(0)
    k_obs, k_params = jax.random.split(key)

    n_action = 2  # act() indexes action[0] and action[1]
    params = init_params(k_params, n_action)
    packed = pack_params(params)

    # Small env-step-like batch: (B, STONE_NUM, 4) -> flattened to (B, 20).
    obs = jax.random.normal(k_obs, (2, STONE_NUM, 4), jnp.float32)
    q = jax.block_until_ready(cnn_qnetwork_forward(obs, packed))
    q_ref = reference_forward(obs, params)
    assert q.shape == (2, n_action)
    assert jnp.allclose(q, q_ref, atol=2e-2, rtol=2e-2), float(jnp.max(jnp.abs(q - q_ref)))

    # Ragged batch (padded to the 128-lane minimum tile, single grid step).
    obs2 = jax.random.normal(jax.random.PRNGKey(1), (37, STONE_NUM, 4), jnp.float32)
    q2 = jax.block_until_ready(cnn_qnetwork_forward(obs2, packed))
    q2_ref = reference_forward(obs2, params)
    assert q2.shape == (37, n_action)
    assert jnp.allclose(q2, q2_ref, atol=2e-2, rtol=2e-2), float(jnp.max(jnp.abs(q2 - q2_ref)))

    # Batch large enough to exercise a multi-step grid (b_pad=256, tb=128, grid=2).
    obs3 = jax.random.normal(jax.random.PRNGKey(2), (200, STONE_NUM, 4), jnp.float32)
    q3 = jax.block_until_ready(cnn_qnetwork_forward(obs3, packed))
    q3_ref = reference_forward(obs3, params)
    assert q3.shape == (200, n_action)
    assert jnp.allclose(q3, q3_ref, atol=2e-2, rtol=2e-2), float(jnp.max(jnp.abs(q3 - q3_ref)))

    print("KERNEL_OK")
</pallas_src>

<mosaic_0001>
module attributes {stable_mosaic.version = 11 : i64} {
  func.func @_qnet_kernel(%arg0: i32, %arg1: memref<20x128xbf16, #tpu.memory_space<vmem>>, %arg2: memref<32x20xbf16, #tpu.memory_space<vmem>>, %arg3: memref<32x1xf32, #tpu.memory_space<vmem>>, %arg4: memref<2x32xf32, #tpu.memory_space<vmem>>, %arg5: memref<2x1xf32, #tpu.memory_space<vmem>>, %arg6: memref<2x128xf32, #tpu.memory_space<vmem>>) attributes {dimension_semantics = [#tpu.dimension_semantics<parallel>], iteration_bounds = array<i64: 1>, scalar_prefetch = 0 : i64, scratch_operands = 0 : i64, tpu.core_type = #tpu.core_type<tc>, window_params = [{transform_indices = @transform_0, window_bounds = array<i64: 20, 128>}, {pipeline_mode = #tpu.pipeline_mode<synchronous>, transform_indices = @transform_1, window_bounds = array<i64: 32, 20>}, {pipeline_mode = #tpu.pipeline_mode<synchronous>, transform_indices = @transform_2, window_bounds = array<i64: 32, 1>}, {pipeline_mode = #tpu.pipeline_mode<synchronous>, transform_indices = @transform_3, window_bounds = array<i64: 2, 32>}, {pipeline_mode = #tpu.pipeline_mode<synchronous>, transform_indices = @transform_4, window_bounds = array<i64: 2, 1>}, {transform_indices = @transform_5, window_bounds = array<i64: 2, 128>}]} {
    %c0 = arith.constant 0 : index
    %c0_0 = arith.constant 0 : index
    %0 = vector.load %arg2[%c0, %c0_0] : memref<32x20xbf16, #tpu.memory_space<vmem>>, vector<32x20xbf16>
    %c0_1 = arith.constant 0 : index
    %c0_2 = arith.constant 0 : index
    %1 = vector.load %arg1[%c0_1, %c0_2] : memref<20x128xbf16, #tpu.memory_space<vmem>>, vector<20x128xbf16>
    %cst = arith.constant dense<0.000000e+00> : vector<32x128xf32>
    %2 = tpu.matmul %0, %1, %cst {dimension_numbers = #tpu.dot_dimension_numbers<[1], [0], [0], [1], [0, 0, 1, 1], [], []>} : vector<32x20xbf16>, vector<20x128xbf16>, vector<32x128xf32> -> vector<32x128xf32>
    %c0_3 = arith.constant 0 : index
    %c0_4 = arith.constant 0 : index
    %3 = vector.load %arg3[%c0_3, %c0_4] : memref<32x1xf32, #tpu.memory_space<vmem>>, vector<32x1xf32>
    %4 = vector.broadcast %3 : vector<32x1xf32> to vector<32x128xf32>
    %5 = arith.addf %2, %4 : vector<32x128xf32>
    %cst_5 = arith.constant 0.000000e+00 : f32
    %6 = vector.broadcast %cst_5 : f32 to vector<32x128xf32>
    %7 = arith.maximumf %5, %6 : vector<32x128xf32>
    %c0_6 = arith.constant 0 : index
    %c0_7 = arith.constant 0 : index
    %8 = vector.load %arg4[%c0_6, %c0_7] : memref<2x32xf32, #tpu.memory_space<vmem>>, vector<2x32xf32>
    %cst_8 = arith.constant dense<0.000000e+00> : vector<2x128xf32>
    %9 = tpu.matmul %8, %7, %cst_8 {dimension_numbers = #tpu.dot_dimension_numbers<[1], [0], [0], [1], [0, 0, 1, 1], [], []>} : vector<2x32xf32>, vector<32x128xf32>, vector<2x128xf32> -> vector<2x128xf32>
    %c0_9 = arith.constant 0 : index
    %c0_10 = arith.constant 0 : index
    %10 = vector.load %arg5[%c0_9, %c0_10] : memref<2x1xf32, #tpu.memory_space<vmem>>, vector<2x1xf32>
    %11 = vector.broadcast %10 : vector<2x1xf32> to vector<2x128xf32>
    %12 = arith.addf %9, %11 : vector<2x128xf32>
    %c0_11 = arith.constant 0 : index
    %c0_12 = arith.constant 0 : index
    %13 = vector.load %arg6[%c0_11, %c0_12] : memref<2x128xf32, #tpu.memory_space<vmem>>, vector<2x128xf32>
    tpu.vector_store %arg6[%c0_11, %c0_12], %12 {strides = array<i32>} : memref<2x128xf32, #tpu.memory_space<vmem>>, vector<2x128xf32>,
    return
  }
  func.func @transform_0(%arg0: i32) -> (i32, i32) {
    %c0_i32 = arith.constant 0 : i32
    %c0_i32_0 = arith.constant 0 : i32
    return %c0_i32, %arg0 : i32, i32
  }
  func.func @transform_1(%arg0: i32) -> (i32, i32) {
    %c0_i32 = arith.constant 0 : i32
    %c0_i32_0 = arith.constant 0 : i32
    %c0_i32_1 = arith.constant 0 : i32
    return %c0_i32, %c0_i32_0 : i32, i32
  }
  func.func @transform_2(%arg0: i32) -> (i32, i32) {
    %c0_i32 = arith.constant 0 : i32
    %c0_i32_0 = arith.constant 0 : i32
    %c0_i32_1 = arith.constant 0 : i32
    return %c0_i32, %c0_i32_0 : i32, i32
  }
  func.func @transform_3(%arg0: i32) -> (i32, i32) {
    %c0_i32 = arith.constant 0 : i32
    %c0_i32_0 = arith.constant 0 : i32
    %c0_i32_1 = arith.constant 0 : i32
    return %c0_i32, %c0_i32_0 : i32, i32
  }
  func.func @transform_4(%arg0: i32) -> (i32, i32) {
    %c0_i32 = arith.constant 0 : i32
    %c0_i32_0 = arith.constant 0 : i32
    %c0_i32_1 = arith.constant 0 : i32
    return %c0_i32, %c0_i32_0 : i32, i32
  }
  func.func @transform_5(%arg0: i32) -> (i32, i32) {
    %c0_i32 = arith.constant 0 : i32
    %c0_i32_0 = arith.constant 0 : i32
    return %c0_i32, %arg0 : i32, i32
  }
}

</mosaic_0001>

<llo_original>
// kernel: _forward_jit.1
$region0: #{_forward_jit.1}
  #allocation0 [shape = 'u32[]', space=smem, size = 0x4, offset = 0x4, fixed_abs, tag = 'smem constant byte address 0x4 - core index']
  #allocation1 [shape = 'u32[144,128]{1,0:T(1,128)}', space=vmem, size = 0x12000, scoped, tag = 'internal scratch']
  %s0 = inlined_call_operand.vmem [shape: bf16[20,128], index: 0, kind: input, shape index: {}]
  %s1 = inlined_call_operand.vmem [shape: bf16[32,20], index: 1, kind: input, shape index: {}]
  %s2 = inlined_call_operand.vmem [shape: f32[32,1], index: 2, kind: input, shape index: {}]
  %s3 = inlined_call_operand.vmem [shape: f32[2,32], index: 3, kind: input, shape index: {}]
  %s4 = inlined_call_operand.vmem [shape: f32[2,1], index: 4, kind: input, shape index: {}]
  %s5 = inlined_call_operand.vmem [shape: f32[2,128], index: 5, kind: output, shape index: {}]
  %s6 = sld [smem:[#allocation0]]
  $region30: #{_forward_jit.1} parent=0
    _
  %s8 = ssub.s32 1, %s6
  %s9 = scalar_select 0, %s8, %s6
  // Predicated region
  $region2: #{_forward_jit.1} parent=0 // pred_check
    _
  $region3: #{_forward_jit.1} parent=0 // pred_check_branch
    %11 = sbr.rel (0) target = $region5
  $region4: #{_forward_jit.1} parent=0 // pred_region
    _
  $region5: #{_forward_jit.1} parent=0 // pred_fallthru
    _
  // Predicated region
  $region6: #{_forward_jit.1} parent=0 // pred_check
    _
  $region7: #{_forward_jit.1} parent=0 // pred_check_branch
    %13 = sbr.rel (0) target = $region9
  $region8: #{_forward_jit.1} parent=0 // pred_region
    _
  $region9: #{_forward_jit.1} parent=0 // pred_fallthru
    _
  // Predicated region
  $region10: #{_forward_jit.1} parent=0 // pred_check
    _
  $region11: #{_forward_jit.1} parent=0 // pred_check_branch
    %15 = sbr.rel (0) target = $region13
  $region12: #{_forward_jit.1} parent=0 // pred_region
    _
  $region13: #{_forward_jit.1} parent=0 // pred_fallthru
    _
  // Predicated region
  $region14: #{_forward_jit.1} parent=0 // pred_check
    _
  $region15: #{_forward_jit.1} parent=0 // pred_check_branch
    %17 = sbr.rel (0) target = $region17
  $region16: #{_forward_jit.1} parent=0 // pred_region
    _
  $region17: #{_forward_jit.1} parent=0 // pred_fallthru
    _
  // Predicated region
  $region18: #{_forward_jit.1} parent=0 // pred_check
    _
  $region19: #{_forward_jit.1} parent=0 // pred_check_branch
    %19 = sbr.rel (0) target = $region21
  $region20: #{_forward_jit.1} parent=0 // pred_region
    _
  $region21: #{_forward_jit.1} parent=0 // pred_fallthru
    _
  %v21 = vld [vmem:[%s1] sm:$0xf]
  %v22 = vld [vmem:[%s1 + $0x4] sm:$0xf]
  %v23 = vld [vmem:[%s1 + $0x8] sm:$0xf]
  %v24 = vld [vmem:[%s1 + $0xc] sm:$0xf]
  %v25 = vld [vmem:[%s0] sm:$0xf]
  %v26 = vld [vmem:[%s0 + $0x4] sm:$0xf]
  %v27 = vld [vmem:[%s0 + $0x8] sm:$0x3]
  %v28 = vld [vmem:[%s2] sm:$0xff]
  %v29 = vld [vmem:[%s2 + $0x8] sm:$0xff]
  %v30 = vld [vmem:[%s2 + $0x10] sm:$0xff]
  %v31 = vld [vmem:[%s2 + $0x18] sm:$0xff]
  %33 = vset.pattern.permute.xlu0 0
  %34 = vperm.xlu0 %33, %v28
  %v35 = vpop.permute.xlu0 %34
  %38 = vset.pattern.permute.xlu0 0
  %39 = vperm.xlu0 %38, %v29
  %v40 = vpop.permute.xlu0 %39
  %43 = vset.pattern.permute.xlu0 0
  %44 = vperm.xlu0 %43, %v30
  %v45 = vpop.permute.xlu0 %44
  %48 = vset.pattern.permute.xlu0 0
  %49 = vperm.xlu0 %48, %v31
  %v50 = vpop.permute.xlu0 %49
  %v56 = vunpack.c.l.b16 %v21
  %v57 = vunpack.c.l.b16 %v22
  %v58 = vunpack.c.l.b16 %v23
  %v59 = vunpack.c.l.b16 %v24
  %v60 = vpack.c.b16 %v57, %v56
  %v61 = vpack.c.b16 %v59, %v58
  %v65 = vunpack.c.l.b16 %v25
  %v66 = vunpack.c.l.b16 %v26
  %v67 = vunpack.c.l.b16 %v27
  %v68 = vpack.c.b16 %v66, %v65
  %v69 = vpack.c.b16 %v67, %v67
  %vm71 = vcmask 162816
  %v73 = vsel %vm71, %v60, 0
  %v76 = vsel %vm71, %v61, 0
  %vm78 = vcmask 1041408
  %v80 = vsel %vm78, %v69, 0
  %82 = vmatprep.subr.bf16.mxu0 0
  %83 = vmatpush1.bf16.msra.mxu0 %v68
  %84 = vmatprep.subr.bf16.mxu0 0
  %85 = vmatpush1.bf16.msra.mxu0 %v80
  %86 = vmatprep.subr.bf16.mxu0 0
  %87 = vmatpush1.bf16.msra.mxu0 0
  %88 = vmatprep.subr.bf16.mxu0 0
  %89 = vmatpush1.bf16.msra.mxu0 0
  %90 = vmatprep.subr.bf16.mxu0 0
  %91 = vmatpush1.bf16.msra.mxu0 0
  %92 = vmatprep.subr.bf16.mxu0 0
  %93 = vmatpush1.bf16.msra.mxu0 0
  %94 = vmatprep.subr.bf16.mxu0 0
  %95 = vmatpush1.bf16.msra.mxu0 0
  %96 = vmatprep.subr.bf16.mxu0 0
  %97 = vmatpush1.bf16.msra.mxu0 0
  %98 = vmatprep.subr.bf16.mxu0 0
  %99 = vmatpush1.bf16.msra.mxu0 0
  %100 = vmatprep.subr.bf16.mxu0 0
  %101 = vmatpush1.bf16.msra.mxu0 0
  %102 = vmatprep.subr.bf16.mxu0 0
  %103 = vmatpush1.bf16.msra.mxu0 0
  %104 = vmatprep.subr.bf16.mxu0 0
  %105 = vmatpush1.bf16.msra.mxu0 0
  %106 = vmatprep.subr.bf16.mxu0 0
  %107 = vmatpush1.bf16.msra.mxu0 0
  %108 = vmatprep.subr.bf16.mxu0 0
  %109 = vmatpush1.bf16.msra.mxu0 0
  %110 = vmatprep.subr.bf16.mxu0 0
  %111 = vmatpush1.bf16.msra.mxu0 0
  %112 = vmatprep.subr.bf16.mxu0 0
  %113 = vmatpush1.bf16.msra.mxu0 0
  %114 = vmatprep.mubr.bf16.mxu0 0
  %115 = vmatmul.mubr.bf16.gmra.mrb[0].mxu0 %v73
  %v116 = vpop.f32.mrb[0].mxu0
  %v117 = vadd.f32 %v35, %v116
  %v118 = vpop.f32.mrb[0].mxu0
  %v119 = vpop.f32.mrb[0].mxu0
  %v120 = vadd.f32 %v40, %v119
  %v121 = vpop.f32.mrb[0].mxu0
  %122 = vmatprep.mubr.bf16.mxu0 0
  %123 = vmatmul.mubr.bf16.gmra.mrb[0].mxu0 %v76
  %v124 = vpop.f32.mrb[0].mxu0
  %v125 = vadd.f32 %v45, %v124
  %v126 = vpop.f32.mrb[0].mxu0
  %v127 = vpop.f32.mrb[0].mxu0
  %v128 = vadd.f32 %v50, %v127
  %v129 = vpop.f32.mrb[0].mxu0
  %130 = vdwg.mxu0
  %v131 = vmax.f32 %v117, 0.0
  %v132 = vmax.f32 %v120, 0.0
  %v133 = vmax.f32 %v125, 0.0
  %v134 = vmax.f32 %v128, 0.0
  %v135 = vld [vmem:[%s3] sm:$0x3]
  %v136 = vld [vmem:[%s4] sm:$0x3]
  %138 = vset.pattern.permute.xlu0 0
  %139 = vperm.xlu0 %138, %v136
  %v140 = vpop.permute.xlu0 %139
  %vm142 = vcmask 261120
  %v144 = vsel %vm142, %v135, 0
  %146 = vmatprep.subr.mxu0 0.0
  %147 = vmatpush1.msra.mxu0 %v131
  %148 = vmatprep.subr.mxu0 0.0
  %149 = vmatpush1.msra.mxu0 %v132
  %150 = vmatprep.subr.mxu0 0.0
  %151 = vmatpush1.msra.mxu0 %v133
  %152 = vmatprep.subr.mxu0 0.0
  %153 = vmatpush1.msra.mxu0 %v134
  %154 = vmatprep.subr.mxu0 0.0
  %155 = vmatpush1.msra.mxu0 0.0
  %156 = vmatprep.subr.mxu0 0.0
  %157 = vmatpush1.msra.mxu0 0.0
  %158 = vmatprep.subr.mxu0 0.0
  %159 = vmatpush1.msra.mxu0 0.0
  %160 = vmatprep.subr.mxu0 0.0
  %161 = vmatpush1.msra.mxu0 0.0
  %162 = vmatprep.subr.mxu0 0.0
  %163 = vmatpush1.msra.mxu0 0.0
  %164 = vmatprep.subr.mxu0 0.0
  %165 = vmatpush1.msra.mxu0 0.0
  %166 = vmatprep.subr.mxu0 0.0
  %167 = vmatpush1.msra.mxu0 0.0
  %168 = vmatprep.subr.mxu0 0.0
  %169 = vmatpush1.msra.mxu0 0.0
  %170 = vmatprep.subr.mxu0 0.0
  %171 = vmatpush1.msra.mxu0 0.0
  %172 = vmatprep.subr.mxu0 0.0
  %173 = vmatpush1.msra.mxu0 0.0
  %174 = vmatprep.subr.mxu0 0.0
  %175 = vmatpush1.msra.mxu0 0.0
  %176 = vmatprep.subr.mxu0 0.0
  %177 = vmatpush1.msra.mxu0 0.0
  %178 = vmatprep.subr.mxu0 0.0
  %179 = vmatpush1.msra.mxu0 0.0
  %180 = vmatprep.subr.mxu0 0.0
  %181 = vmatpush1.msra.mxu0 0.0
  %182 = vmatprep.subr.mxu0 0.0
  %183 = vmatpush1.msra.mxu0 0.0
  %184 = vmatprep.subr.mxu0 0.0
  %185 = vmatpush1.msra.mxu0 0.0
  %186 = vmatprep.subr.mxu0 0.0
  %187 = vmatpush1.msra.mxu0 0.0
  %188 = vmatprep.subr.mxu0 0.0
  %189 = vmatpush1.msra.mxu0 0.0
  %190 = vmatprep.subr.mxu0 0.0
  %191 = vmatpush1.msra.mxu0 0.0
  %192 = vmatprep.subr.mxu0 0.0
  %193 = vmatpush1.msra.mxu0 0.0
  %194 = vmatprep.subr.mxu0 0.0
  %195 = vmatpush1.msra.mxu0 0.0
  %196 = vmatprep.subr.mxu0 0.0
  %197 = vmatpush1.msra.mxu0 0.0
  %198 = vmatprep.subr.mxu0 0.0
  %199 = vmatpush1.msra.mxu0 0.0
  %200 = vmatprep.subr.mxu0 0.0
  %201 = vmatpush1.msra.mxu0 0.0
  %202 = vmatprep.subr.mxu0 0.0
  %203 = vmatpush1.msra.mxu0 0.0
  %204 = vmatprep.subr.mxu0 0.0
  %205 = vmatpush1.msra.mxu0 0.0
  %206 = vmatprep.subr.mxu0 0.0
  %207 = vmatpush1.msra.mxu0 0.0
  %208 = vmatprep.subr.mxu0 0.0
  %209 = vmatpush1.msra.mxu0 0.0
  %210 = vmatprep.mubr.f32.mxu0 0.0
  %211 = vmatmul.mubr.f32.gmra.mrb[0].mxu0 %v144
  %v212 = vpop.f32.mrb[0].mxu0
  %v213 = vadd.f32 %v140, %v212
  %v214 = vpop.f32.mrb[0].mxu0
  %215 = vdwg.mxu0
  %216 = vst [vmem:[%s5] sm:$0x3] %v213
  // Predicated region
  $region22: #{_forward_jit.1} parent=0 // pred_check
    _
  $region23: #{_forward_jit.1} parent=0 // pred_check_branch
    %218 = sbr.rel (0) target = $region25
  $region24: #{_forward_jit.1} parent=0 // pred_region
    _
  $region25: #{_forward_jit.1} parent=0 // pred_fallthru
    _
  // Predicated region
  $region26: #{_forward_jit.1} parent=0 // pred_check
    _
  $region27: #{_forward_jit.1} parent=0 // pred_check_branch
    %220 = sbr.rel (0) target = $region29
  $region28: #{_forward_jit.1} parent=0 // pred_region
    _
  $region29: #{_forward_jit.1} parent=0 // pred_fallthru
    _

</llo_original>
